<compile_context>
chip_gen: v7x
topology: tpu7x:2x2x1
jax: 0.10.0
libtpu: 0.0.40
codegen_flags: <defaults>
</compile_context>

<pallas_src>
import jax
import jax.numpy as jnp
import numpy as np
from jax.experimental import pallas as pl
from jax.experimental.pallas import tpu as pltpu

# ---- model hyper-parameters (small, consistent with the module) ----
CONTEXT_SIZE = 8      # T
VOCAB_SIZE   = 65     # V (chargpt char vocab)
VOCAB_PAD    = 128    # lane-dense padded vocab for the output store
EMBED_SIZE   = 32     # E
N_HEADS      = 4      # H
HEAD_SIZE    = 8      # D  (= E // H)
HIDDEN_SIZE  = 64     # F
BATCH        = 2      # B

# power-of-two shift amounts used for the packed-attention block masks
assert CONTEXT_SIZE & (CONTEXT_SIZE - 1) == 0
assert EMBED_SIZE & (EMBED_SIZE - 1) == 0
assert (BATCH * CONTEXT_SIZE) & (BATCH * CONTEXT_SIZE - 1) == 0
_LG_T  = CONTEXT_SIZE.bit_length() - 1                 # log2(T)  = 3
_LG_BT = (BATCH * CONTEXT_SIZE).bit_length() - 1       # log2(BT) = 4
_LG_E  = EMBED_SIZE.bit_length() - 1                   # log2(E)  = 5


def lm_kernel(x_ref, wqkv_ref, wa_ref, ba_ref, wb_ref, bb_ref, out_ref):
    """Whole batch in one invocation: packed attention + folded FFN/vocab projection."""
    B, T, H, D, E = BATCH, CONTEXT_SIZE, N_HEADS, HEAD_SIZE, EMBED_SIZE
    BT = B * T            # 16 token rows
    G = H * BT            # 64 packed (head, batch, time) rows

    x = x_ref[...]                                                    # (BT, E) f32

    # ---- packed QKV projection ------------------------------------------------
    # Build block-diagonal X_wide (G, H*E): row r = h*BT + m holds x[m] in
    # columns [h*E, (h+1)*E) and zeros elsewhere, so ONE matmul against the
    # prep-time stacked per-head weights yields q/k/v already in packed layout.
    x_tall = jnp.concatenate([x] * H, axis=0)                         # (G, E)
    x_rep = jnp.concatenate([x_tall] * H, axis=1)                     # (G, H*E)
    rr = jax.lax.broadcasted_iota(jnp.int32, (G, H * E), 0)
    cc = jax.lax.broadcasted_iota(jnp.int32, (G, H * E), 1)
    x_wide = jnp.where((rr >> _LG_BT) == (cc >> _LG_E), x_rep, 0.0)   # (G, H*E)

    qkv = jnp.dot(x_wide, wqkv_ref[...],
                  preferred_element_type=jnp.float32)                 # (G, 3*D)
    qp = qkv[:, 0 * D:1 * D]     # (G, D) — 1/sqrt(D) already folded into weights
    kp = qkv[:, 1 * D:2 * D]
    vp = qkv[:, 2 * D:3 * D]

    # ---- one masked 64x64 attention --------------------------------------------
    s = jax.lax.dot_general(qp, kp, (((1,), (1,)), ((), ())),
                            preferred_element_type=jnp.float32)       # (G, G)
    r = jax.lax.broadcasted_iota(jnp.int32, (G, G), 0)
    c = jax.lax.broadcasted_iota(jnp.int32, (G, G), 1)
    # same (head, batch) block of T rows AND causal within the block
    mask = ((r >> _LG_T) == (c >> _LG_T)) & (c <= r)
    s = jnp.where(mask, s, jnp.float32(-1e30))                        # finite mask
    s = s - jnp.max(s, axis=-1, keepdims=True)
    p = jnp.exp(s)
    p = p * pl.reciprocal(jnp.sum(p, axis=-1, keepdims=True), approx=True)
    o = jnp.dot(p, vp, preferred_element_type=jnp.float32)            # (G, D)

    # ---- merge heads back to (BT, H*D): aligned sublane slices + lane concat ----
    attn = jnp.concatenate([o[h * BT:(h + 1) * BT, :] for h in range(H)],
                           axis=1)                                    # (BT, H*D)

    # ---- folded (wo -> w1) FFN front half + ReLU --------------------------------
    h1 = jnp.maximum(
        jnp.dot(attn, wa_ref[...], preferred_element_type=jnp.float32) + ba_ref[...],
        0.0)                                                          # (BT, F)

    # ---- folded (w2 -> wout) back half: lane-dense padded logits ----------------
    logits = jnp.dot(h1, wb_ref[...], preferred_element_type=jnp.float32) + bb_ref[...]
    out_ref[...] = logits.astype(out_ref.dtype)                       # (BT, VOCAB_PAD)


def lm_forward_pallas(x_emb, kparams):
    """x_emb: (B, T, E) f32 (token + position embeddings already added).

    Returns lane-padded logits (B, T, VOCAB_PAD); real vocab lives in [:, :, :VOCAB_SIZE]
    (keep padded for a downstream consumer / fold the slice into the loss).
    """
    B, T, E = x_emb.shape
    x_flat = x_emb.reshape(B * T, E)

    weight_order = ["w_qkv_stack", "w_a", "b_a", "w_b", "b_b"]
    weights = [kparams[k] for k in weight_order]

    vmem_spec = pl.BlockSpec(memory_space=pltpu.MemorySpace.VMEM)

    return pl.pallas_call(
        lm_kernel,
        out_shape=jax.ShapeDtypeStruct((B * T, VOCAB_PAD), jnp.float32),
        in_specs=[vmem_spec] * (1 + len(weights)),
        out_specs=vmem_spec,
    )(x_flat, *weights).reshape(B, T, VOCAB_PAD)


def prepare_kernel_weights(params):
    """One-time constant folds (exact algebra — no nonlinearity between fused layers)."""
    H, D, E = N_HEADS, HEAD_SIZE, EMBED_SIZE
    scale = jnp.float32(1.0 / np.sqrt(D))

    # Stacked per-head QKV weights for the block-diagonal packed projection:
    # rows [h*E, (h+1)*E) hold [ wq_h * scale | wk_h | wv_h ]  -> (H*E, 3*D)
    blocks = []
    for h in range(H):
        blocks.append(jnp.concatenate(
            [params["wq"][:, h * D:(h + 1) * D] * scale,
             params["wk"][:, h * D:(h + 1) * D],
             params["wv"][:, h * D:(h + 1) * D]], axis=1))            # (E, 3*D)
    w_qkv_stack = jnp.concatenate(blocks, axis=0)                     # (H*E, 3*D)

    # Fold attention output projection into FFN layer 1.
    w_a = params["wo"] @ params["w1"]                                 # (H*D, F)
    b_a = params["bo"] @ params["w1"] + params["b1"]                  # (1, F)

    # Fold FFN layer 2 into the lane-padded vocab projection.
    wout_p = jnp.zeros((E, VOCAB_PAD), jnp.float32).at[:, :VOCAB_SIZE].set(params["wout"])
    bout_p = jnp.zeros((1, VOCAB_PAD), jnp.float32).at[:, :VOCAB_SIZE].set(params["bout"])
    w_b = params["w2"] @ wout_p                                       # (F, VOCAB_PAD)
    b_b = params["b2"] @ wout_p + bout_p                              # (1, VOCAB_PAD)

    return {"w_qkv_stack": w_qkv_stack, "w_a": w_a, "b_a": b_a, "w_b": w_b, "b_b": b_b}


def init_params(key):
    ks = jax.random.split(key, 16)
    HD = N_HEADS * HEAD_SIZE

    def lin(k, fan_in, fan_out):
        bound = 1.0 / np.sqrt(fan_in)
        return jax.random.uniform(k, (fan_in, fan_out), jnp.float32, -bound, bound)

    return {
        "tok_emb": jax.random.normal(ks[0], (VOCAB_SIZE, EMBED_SIZE), jnp.float32) * 0.02,
        "pos_emb": jax.random.normal(ks[1], (CONTEXT_SIZE, EMBED_SIZE), jnp.float32) * 0.02,
        # q/k/v: per-head Linear(E, D, bias=False) packed as (E, H*D)
        "wq": lin(ks[2], EMBED_SIZE, HD),
        "wk": lin(ks[3], EMBED_SIZE, HD),
        "wv": lin(ks[4], EMBED_SIZE, HD),
        # attention output projection (H*D -> E), with bias
        "wo": lin(ks[5], HD, EMBED_SIZE),
        "bo": jax.random.uniform(ks[6], (1, EMBED_SIZE), jnp.float32, -0.05, 0.05),
        # feed-forward
        "w1": lin(ks[7], EMBED_SIZE, HIDDEN_SIZE),
        "b1": jax.random.uniform(ks[8], (1, HIDDEN_SIZE), jnp.float32, -0.05, 0.05),
        "w2": lin(ks[9], HIDDEN_SIZE, EMBED_SIZE),
        "b2": jax.random.uniform(ks[10], (1, EMBED_SIZE), jnp.float32, -0.05, 0.05),
        # output layer
        "wout": lin(ks[11], EMBED_SIZE, VOCAB_SIZE),
        "bout": jax.random.uniform(ks[12], (1, VOCAB_SIZE), jnp.float32, -0.05, 0.05),
    }


def reference_forward(tokens, params):
    """Pure-JAX reference of the same math (canonical, unfused weights)."""
    B, T = tokens.shape
    x = params["tok_emb"][tokens] + params["pos_emb"][jnp.arange(T)]      # (B, T, E)
    q = x @ params["wq"]; k = x @ params["wk"]; v = x @ params["wv"]      # (B, T, H*D)
    q = q.reshape(B, T, N_HEADS, HEAD_SIZE)
    k = k.reshape(B, T, N_HEADS, HEAD_SIZE)
    v = v.reshape(B, T, N_HEADS, HEAD_SIZE)
    s = jnp.einsum("bqhd,bkhd->bhqk", q, k) / np.sqrt(HEAD_SIZE)
    mask = jnp.tril(jnp.ones((T, T), bool))
    s = jnp.where(mask[None, None], s, -jnp.inf)
    p = jax.nn.softmax(s, axis=-1)
    o = jnp.einsum("bhqk,bkhd->bqhd", p, v).reshape(B, T, N_HEADS * HEAD_SIZE)
    attn = o @ params["wo"] + params["bo"][0]
    ff = jnp.maximum(attn @ params["w1"] + params["b1"][0], 0.0) @ params["w2"] + params["b2"][0]
    return ff @ params["wout"] + params["bout"][0]


if __name__ == "__main__":
    key = jax.random.PRNGKey(0)
    pkey, tkey = jax.random.split(key)
    params = init_params(pkey)
    kparams = prepare_kernel_weights(params)

    # deterministic token inputs: (B, T) int32 in [0, VOCAB_SIZE)
    tokens = jax.random.randint(tkey, (BATCH, CONTEXT_SIZE), 0, VOCAB_SIZE, dtype=jnp.int32)

    # Embedding gather kept as plain-JAX glue; the dense hot path runs in the kernel.
    # TODO(synk): optionally fold this gather into the kernel via scalar-prefetched tokens.
    T = tokens.shape[1]
    x_emb = params["tok_emb"][tokens] + params["pos_emb"][jnp.arange(T)]  # (B, T, E)

    logits_pad = lm_forward_pallas(x_emb, kparams)
    logits_pad = jax.block_until_ready(logits_pad)

    # Un-pad only for the correctness check (downstream code can keep the padded form).
    logits = np.asarray(logits_pad)[:, :, :VOCAB_SIZE]

    ref = np.asarray(jax.block_until_ready(reference_forward(tokens, params)))
    np.testing.assert_allclose(logits, ref, rtol=2e-3, atol=2e-3)

    assert logits.shape == (BATCH, CONTEXT_SIZE, VOCAB_SIZE)
    print("KERNEL_OK")
</pallas_src>

<mosaic_0001>
module attributes {stable_mosaic.version = 11 : i64} {
  func.func @lm_kernel(%arg0: memref<16x32xf32, #tpu.memory_space<vmem>>, %arg1: memref<128x24xf32, #tpu.memory_space<vmem>>, %arg2: memref<32x64xf32, #tpu.memory_space<vmem>>, %arg3: memref<1x64xf32, #tpu.memory_space<vmem>>, %arg4: memref<64x128xf32, #tpu.memory_space<vmem>>, %arg5: memref<1x128xf32, #tpu.memory_space<vmem>>, %arg6: memref<16x128xf32, #tpu.memory_space<vmem>>) attributes {dimension_semantics = [], scalar_prefetch = 0 : i64, scratch_operands = 0 : i64, tpu.core_type = #tpu.core_type<tc>} {
    %c0 = arith.constant 0 : index
    %c0_0 = arith.constant 0 : index
    %0 = vector.load %arg0[%c0, %c0_0] : memref<16x32xf32, #tpu.memory_space<vmem>>, vector<16x32xf32>
    %1 = tpu.concatenate %0, %0, %0, %0 in 0 : vector<16x32xf32>, vector<16x32xf32>, vector<16x32xf32>, vector<16x32xf32> -> vector<64x32xf32>
    %2 = tpu.concatenate %1, %1, %1, %1 in 1 : vector<64x32xf32>, vector<64x32xf32>, vector<64x32xf32>, vector<64x32xf32> -> vector<64x128xf32>
    %3 = tpu.iota {dimensions = array<i32: 0>} : vector<64x128xi32>
    %4 = tpu.iota {dimensions = array<i32: 1>} : vector<64x128xi32>
    %c4_i32 = arith.constant 4 : i32
    %5 = vector.broadcast %c4_i32 : i32 to vector<64x128xi32>
    %6 = arith.shrsi %3, %5 : vector<64x128xi32>
    %c5_i32 = arith.constant 5 : i32
    %7 = vector.broadcast %c5_i32 : i32 to vector<64x128xi32>
    %8 = arith.shrsi %4, %7 : vector<64x128xi32>
    %9 = arith.cmpi eq, %6, %8 : vector<64x128xi32>
    %cst = arith.constant 0.000000e+00 : f32
    %10 = vector.broadcast %cst : f32 to vector<64x128xf32>
    %11 = arith.select %9, %2, %10 : vector<64x128xi1>, vector<64x128xf32>
    %c0_1 = arith.constant 0 : index
    %c0_2 = arith.constant 0 : index
    %12 = vector.load %arg1[%c0_1, %c0_2] : memref<128x24xf32, #tpu.memory_space<vmem>>, vector<128x24xf32>
    %cst_3 = arith.constant dense<0.000000e+00> : vector<64x24xf32>
    %13 = tpu.matmul %11, %12, %cst_3 {dimension_numbers = #tpu.dot_dimension_numbers<[1], [0], [0], [1], [0, 0, 1, 1], [], []>} : vector<64x128xf32>, vector<128x24xf32>, vector<64x24xf32> -> vector<64x24xf32>
    %14 = vector.extract_strided_slice %13 {offsets = [0, 0], sizes = [64, 8], strides = [1, 1]} : vector<64x24xf32> to vector<64x8xf32>
    %15 = vector.extract_strided_slice %13 {offsets = [0, 8], sizes = [64, 8], strides = [1, 1]} : vector<64x24xf32> to vector<64x8xf32>
    %16 = vector.extract_strided_slice %13 {offsets = [0, 16], sizes = [64, 8], strides = [1, 1]} : vector<64x24xf32> to vector<64x8xf32>
    %cst_4 = arith.constant dense<0.000000e+00> : vector<64x64xf32>
    %17 = tpu.matmul %14, %15, %cst_4 {dimension_numbers = #tpu.dot_dimension_numbers<[1], [1], [0], [0], [0, 0, 1, 0], [], []>} : vector<64x8xf32>, vector<64x8xf32>, vector<64x64xf32> -> vector<64x64xf32>
    %18 = tpu.iota {dimensions = array<i32: 0>} : vector<64x64xi32>
    %19 = tpu.iota {dimensions = array<i32: 1>} : vector<64x64xi32>
    %c3_i32 = arith.constant 3 : i32
    %20 = vector.broadcast %c3_i32 : i32 to vector<64x64xi32>
    %21 = arith.shrsi %18, %20 : vector<64x64xi32>
    %c3_i32_5 = arith.constant 3 : i32
    %22 = vector.broadcast %c3_i32_5 : i32 to vector<64x64xi32>
    %23 = arith.shrsi %19, %22 : vector<64x64xi32>
    %24 = arith.cmpi eq, %21, %23 : vector<64x64xi32>
    %25 = arith.cmpi sle, %19, %18 : vector<64x64xi32>
    %26 = arith.andi %24, %25 : vector<64x64xi1>
    %cst_6 = arith.constant -1.000000e+30 : f32
    %27 = vector.broadcast %cst_6 : f32 to vector<64x64xf32>
    %28 = arith.select %26, %17, %27 : vector<64x64xi1>, vector<64x64xf32>
    %cst_7 = arith.constant dense<0xFF800000> : vector<64xf32>
    %29 = vector.multi_reduction <maximumf>, %28, %cst_7 [1] : vector<64x64xf32> to vector<64xf32>
    %30 = vector.shape_cast %29 : vector<64xf32> to vector<64x1xf32>
    %31 = vector.broadcast %30 : vector<64x1xf32> to vector<64x64xf32>
    %32 = arith.subf %28, %31 : vector<64x64xf32>
    %33 = math.exp %32 : vector<64x64xf32>
    %cst_8 = arith.constant dense<0.000000e+00> : vector<64xf32>
    %34 = vector.multi_reduction <add>, %33, %cst_8 [1] : vector<64x64xf32> to vector<64xf32>
    %35 = vector.shape_cast %34 : vector<64xf32> to vector<64x1xf32>
    %36 = tpu.reciprocal %35 {approx = true} : vector<64x1xf32> -> vector<64x1xf32>
    %37 = vector.broadcast %36 : vector<64x1xf32> to vector<64x64xf32>
    %38 = arith.mulf %33, %37 : vector<64x64xf32>
    %cst_9 = arith.constant dense<0.000000e+00> : vector<64x8xf32>
    %39 = tpu.matmul %38, %16, %cst_9 {dimension_numbers = #tpu.dot_dimension_numbers<[1], [0], [0], [1], [0, 0, 1, 1], [], []>} : vector<64x64xf32>, vector<64x8xf32>, vector<64x8xf32> -> vector<64x8xf32>
    %40 = vector.extract_strided_slice %39 {offsets = [0, 0], sizes = [16, 8], strides = [1, 1]} : vector<64x8xf32> to vector<16x8xf32>
    %41 = vector.extract_strided_slice %39 {offsets = [16, 0], sizes = [16, 8], strides = [1, 1]} : vector<64x8xf32> to vector<16x8xf32>
    %42 = vector.extract_strided_slice %39 {offsets = [32, 0], sizes = [16, 8], strides = [1, 1]} : vector<64x8xf32> to vector<16x8xf32>
    %43 = vector.extract_strided_slice %39 {offsets = [48, 0], sizes = [16, 8], strides = [1, 1]} : vector<64x8xf32> to vector<16x8xf32>
    %44 = tpu.concatenate %40, %41, %42, %43 in 1 : vector<16x8xf32>, vector<16x8xf32>, vector<16x8xf32>, vector<16x8xf32> -> vector<16x32xf32>
    %c0_10 = arith.constant 0 : index
    %c0_11 = arith.constant 0 : index
    %45 = vector.load %arg2[%c0_10, %c0_11] : memref<32x64xf32, #tpu.memory_space<vmem>>, vector<32x64xf32>
    %cst_12 = arith.constant dense<0.000000e+00> : vector<16x64xf32>
    %46 = tpu.matmul %44, %45, %cst_12 {dimension_numbers = #tpu.dot_dimension_numbers<[1], [0], [0], [1], [0, 0, 1, 1], [], []>} : vector<16x32xf32>, vector<32x64xf32>, vector<16x64xf32> -> vector<16x64xf32>
    %c0_13 = arith.constant 0 : index
    %c0_14 = arith.constant 0 : index
    %47 = vector.load %arg3[%c0_13, %c0_14] : memref<1x64xf32, #tpu.memory_space<vmem>>, vector<1x64xf32>
    %48 = vector.broadcast %47 : vector<1x64xf32> to vector<16x64xf32>
    %49 = arith.addf %46, %48 : vector<16x64xf32>
    %cst_15 = arith.constant 0.000000e+00 : f32
    %50 = vector.broadcast %cst_15 : f32 to vector<16x64xf32>
    %51 = arith.maximumf %49, %50 : vector<16x64xf32>
    %c0_16 = arith.constant 0 : index
    %c0_17 = arith.constant 0 : index
    %52 = vector.load %arg4[%c0_16, %c0_17] : memref<64x128xf32, #tpu.memory_space<vmem>>, vector<64x128xf32>
    %cst_18 = arith.constant dense<0.000000e+00> : vector<16x128xf32>
    %53 = tpu.matmul %51, %52, %cst_18 {dimension_numbers = #tpu.dot_dimension_numbers<[1], [0], [0], [1], [0, 0, 1, 1], [], []>} : vector<16x64xf32>, vector<64x128xf32>, vector<16x128xf32> -> vector<16x128xf32>
    %c0_19 = arith.constant 0 : index
    %c0_20 = arith.constant 0 : index
    %54 = vector.load %arg5[%c0_19, %c0_20] : memref<1x128xf32, #tpu.memory_space<vmem>>, vector<1x128xf32>
    %55 = vector.broadcast %54 : vector<1x128xf32> to vector<16x128xf32>
    %56 = arith.addf %53, %55 : vector<16x128xf32>
    %c0_21 = arith.constant 0 : index
    %c0_22 = arith.constant 0 : index
    %57 = vector.load %arg6[%c0_21, %c0_22] : memref<16x128xf32, #tpu.memory_space<vmem>>, vector<16x128xf32>
    tpu.vector_store %arg6[%c0_21, %c0_22], %56 {strides = array<i32>} : memref<16x128xf32, #tpu.memory_space<vmem>>, vector<16x128xf32>,
    return
  }
}

</mosaic_0001>

<llo_original>
// kernel: tpu_custom_call.1
$region0: #{tpu_custom_call.1}
  #allocation0 [shape = 'u32[]', space=smem, size = 0x4, offset = 0x4, fixed_abs, tag = 'smem constant byte address 0x4 - core index']
  #allocation1 [shape = 'u32[144,128]{1,0:T(1,128)}', space=vmem, size = 0x12000, scoped, tag = 'internal scratch']
  %s0 = inlined_call_operand.vmem [shape: f32[16,32], index: 0, kind: input, shape index: {}]
  %s1 = inlined_call_operand.vmem [shape: f32[128,24], index: 1, kind: input, shape index: {}]
  %s2 = inlined_call_operand.vmem [shape: f32[32,64], index: 2, kind: input, shape index: {}]
  %s3 = inlined_call_operand.vmem [shape: f32[1,64], index: 3, kind: input, shape index: {}]
  %s4 = inlined_call_operand.vmem [shape: f32[64,128], index: 4, kind: input, shape index: {}]
  %s5 = inlined_call_operand.vmem [shape: f32[1,128], index: 5, kind: input, shape index: {}]
  %s6 = inlined_call_operand.hbm [shape: f32[16,128], index: 6, kind: output, shape index: {}]
  %s7 = sld [smem:[#allocation0]]
  $region34: #{tpu_custom_call.1} parent=0
    _
  %s9 = ssub.s32 1, %s7
  %s10 = scalar_select 0, %s9, %s7
  $region1: #{tpu_custom_call.1} parent=0
    #allocation2 [shape = 'u8[8192]{0}', space=vmem, size = 0x2000, scoped, tag = 'output window, operand 0, single buffered']
    #allocation3 [shape = 's32[1]{0}', space=sflag, size = 0x4, scoped, tag = 'scoped memory for tpu_custom_call.1']
    %11 = vsyncpa [#allocation3], 0
    // Predicated region
    $region2: #{tpu_custom_call.1} parent=1 // pred_check
      _
    $region3: #{tpu_custom_call.1} parent=1 // pred_check_branch
      %13 = sbr.rel (0) target = $region5
    $region4: #{tpu_custom_call.1} parent=1 // pred_region
      _
    $region5: #{tpu_custom_call.1} parent=1 // pred_fallthru
      _
    // Predicated region
    $region6: #{tpu_custom_call.1} parent=1 // pred_check
      _
    $region7: #{tpu_custom_call.1} parent=1 // pred_check_branch
      %15 = sbr.rel (0) target = $region9
    $region8: #{tpu_custom_call.1} parent=1 // pred_region
      _
    $region9: #{tpu_custom_call.1} parent=1 // pred_fallthru
      _
    // Predicated region
    $region10: #{tpu_custom_call.1} parent=1 // pred_check
      _
    $region11: #{tpu_custom_call.1} parent=1 // pred_check_branch
      %17 = sbr.rel (0) target = $region13
    $region12: #{tpu_custom_call.1} parent=1 // pred_region
      _
    $region13: #{tpu_custom_call.1} parent=1 // pred_fallthru
      _
    // Predicated region
    $region14: #{tpu_custom_call.1} parent=1 // pred_check
      _
    $region15: #{tpu_custom_call.1} parent=1 // pred_check_branch
      %19 = sbr.rel (0) target = $region17
    $region16: #{tpu_custom_call.1} parent=1 // pred_region
      _
    $region17: #{tpu_custom_call.1} parent=1 // pred_fallthru
      _
    // Predicated region
    $region18: #{tpu_custom_call.1} parent=1 // pred_check
      _
    $region19: #{tpu_custom_call.1} parent=1 // pred_check_branch
      %21 = sbr.rel (0) target = $region21
    $region20: #{tpu_custom_call.1} parent=1 // pred_region
      _
    $region21: #{tpu_custom_call.1} parent=1 // pred_fallthru
      _
    // Predicated region
    $region22: #{tpu_custom_call.1} parent=1 // pred_check
      _
    $region23: #{tpu_custom_call.1} parent=1 // pred_check_branch
      %23 = sbr.rel (0) target = $region25
    $region24: #{tpu_custom_call.1} parent=1 // pred_region
      _
    $region25: #{tpu_custom_call.1} parent=1 // pred_fallthru
      _
    %v24 = vld [vmem:[%s0] sm:$0xff]
    %v25 = vld [vmem:[%s0 + $0x8] sm:$0xff]
    %28 = vrot.lane.b32.xlu0 %v24, 32
    %v29 = vpop.permute.xlu0 %28
    %30 = vrot.lane.b32.xlu0 %v25, 32
    %v31 = vpop.permute.xlu0 %30
    %34 = vrot.lane.b32.xlu0 %v24, 64
    %v35 = vpop.permute.xlu0 %34
    %36 = vrot.lane.b32.xlu0 %v25, 64
    %v37 = vpop.permute.xlu0 %36
    %40 = vrot.lane.b32.xlu0 %v24, 96
    %v41 = vpop.permute.xlu0 %40
    %42 = vrot.lane.b32.xlu0 %v25, 96
    %v43 = vpop.permute.xlu0 %42
    %vm46 = vcmask 261120
    %v47 = vsel %vm46, %v24, %v29
    %v48 = vsel %vm46, %v25, %v31
    %vm49 = vcmask 523264
    %v50 = vsel %vm49, %v47, %v35
    %v51 = vsel %vm49, %v48, %v37
    %vm52 = vcmask 785408
    %v53 = vsel %vm52, %v50, %v41
    %v54 = vsel %vm52, %v51, %v43
    %v55 = vlaneseq
    %v56 = vshrl.u32 %v55, 7
    %v57 = vadd.s32 %v56, 8
    %v58 = vadd.s32 %v56, 16
    %v59 = vadd.s32 %v56, 24
    %v60 = vadd.s32 %v56, 32
    %v61 = vadd.s32 %v56, 40
    %v62 = vadd.s32 %v56, 48
    %v63 = vadd.s32 %v56, 56
    %v64 = vlaneseq
    %v65 = vand.u32 %v64, 127
    %v66 = vshra.s32 %v56, 4
    %v67 = vshra.s32 %v57, 4
    %v68 = vshra.s32 %v58, 4
    %v69 = vshra.s32 %v59, 4
    %v70 = vshra.s32 %v60, 4
    %v71 = vshra.s32 %v61, 4
    %v72 = vshra.s32 %v62, 4
    %v73 = vshra.s32 %v63, 4
    %v74 = vshra.s32 %v65, 5
    %vm75 = vcmp.eq.s32.totalorder %v66, %v74
    %vm76 = vcmp.eq.s32.totalorder %v67, %v74
    %vm77 = vcmp.eq.s32.totalorder %v68, %v74
    %vm78 = vcmp.eq.s32.totalorder %v69, %v74
    %vm79 = vcmp.eq.s32.totalorder %v70, %v74
    %vm80 = vcmp.eq.s32.totalorder %v71, %v74
    %vm81 = vcmp.eq.s32.totalorder %v72, %v74
    %vm82 = vcmp.eq.s32.totalorder %v73, %v74
    %v83 = vsel %vm75, %v53, 0.0
    %v84 = vsel %vm76, %v54, 0.0
    %v85 = vsel %vm77, %v53, 0.0
    %v86 = vsel %vm78, %v54, 0.0
    %v87 = vsel %vm79, %v53, 0.0
    %v88 = vsel %vm80, %v54, 0.0
    %v89 = vsel %vm81, %v53, 0.0
    %v90 = vsel %vm82, %v54, 0.0
    %v91 = vld [vmem:[%s1] sm:$0xff]
    %v92 = vld [vmem:[%s1 + $0x8] sm:$0xff]
    %v93 = vld [vmem:[%s1 + $0x10] sm:$0xff]
    %v94 = vld [vmem:[%s1 + $0x18] sm:$0xff]
    %v95 = vld [vmem:[%s1 + $0x20] sm:$0xff]
    %v96 = vld [vmem:[%s1 + $0x28] sm:$0xff]
    %v97 = vld [vmem:[%s1 + $0x30] sm:$0xff]
    %v98 = vld [vmem:[%s1 + $0x38] sm:$0xff]
    %v99 = vld [vmem:[%s1 + $0x40] sm:$0xff]
    %v100 = vld [vmem:[%s1 + $0x48] sm:$0xff]
    %v101 = vld [vmem:[%s1 + $0x50] sm:$0xff]
    %v102 = vld [vmem:[%s1 + $0x58] sm:$0xff]
    %v103 = vld [vmem:[%s1 + $0x60] sm:$0xff]
    %v104 = vld [vmem:[%s1 + $0x68] sm:$0xff]
    %v105 = vld [vmem:[%s1 + $0x70] sm:$0xff]
    %v106 = vld [vmem:[%s1 + $0x78] sm:$0xff]
    %107 = vmatprep.subr.mxu0 0.0
    %108 = vmatpush1.msra.mxu0 %v91
    %109 = vmatprep.subr.mxu0 0.0
    %110 = vmatpush1.msra.mxu0 %v92
    %111 = vmatprep.subr.mxu0 0.0
    %112 = vmatpush1.msra.mxu0 %v93
    %113 = vmatprep.subr.mxu0 0.0
    %114 = vmatpush1.msra.mxu0 %v94
    %115 = vmatprep.subr.mxu0 0.0
    %116 = vmatpush1.msra.mxu0 %v95
    %117 = vmatprep.subr.mxu0 0.0
    %118 = vmatpush1.msra.mxu0 %v96
    %119 = vmatprep.subr.mxu0 0.0
    %120 = vmatpush1.msra.mxu0 %v97
    %121 = vmatprep.subr.mxu0 0.0
    %122 = vmatpush1.msra.mxu0 %v98
    %123 = vmatprep.subr.mxu0 0.0
    %124 = vmatpush1.msra.mxu0 %v99
    %125 = vmatprep.subr.mxu0 0.0
    %126 = vmatpush1.msra.mxu0 %v100
    %127 = vmatprep.subr.mxu0 0.0
    %128 = vmatpush1.msra.mxu0 %v101
    %129 = vmatprep.subr.mxu0 0.0
    %130 = vmatpush1.msra.mxu0 %v102
    %131 = vmatprep.subr.mxu0 0.0
    %132 = vmatpush1.msra.mxu0 %v103
    %133 = vmatprep.subr.mxu0 0.0
    %134 = vmatpush1.msra.mxu0 %v104
    %135 = vmatprep.subr.mxu0 0.0
    %136 = vmatpush1.msra.mxu0 %v105
    %137 = vmatprep.subr.mxu0 0.0
    %138 = vmatpush1.msra.mxu0 %v106
    %139 = vmatprep.subr.mxu0 0.0
    %140 = vmatpush1.msra.mxu0 0.0
    %141 = vmatprep.subr.mxu0 0.0
    %142 = vmatpush1.msra.mxu0 0.0
    %143 = vmatprep.subr.mxu0 0.0
    %144 = vmatpush1.msra.mxu0 0.0
    %145 = vmatprep.subr.mxu0 0.0
    %146 = vmatpush1.msra.mxu0 0.0
    %147 = vmatprep.subr.mxu0 0.0
    %148 = vmatpush1.msra.mxu0 0.0
    %149 = vmatprep.subr.mxu0 0.0
    %150 = vmatpush1.msra.mxu0 0.0
    %151 = vmatprep.subr.mxu0 0.0
    %152 = vmatpush1.msra.mxu0 0.0
    %153 = vmatprep.subr.mxu0 0.0
    %154 = vmatpush1.msra.mxu0 0.0
    %155 = vmatprep.subr.mxu0 0.0
    %156 = vmatpush1.msra.mxu0 0.0
    %157 = vmatprep.subr.mxu0 0.0
    %158 = vmatpush1.msra.mxu0 0.0
    %159 = vmatprep.subr.mxu0 0.0
    %160 = vmatpush1.msra.mxu0 0.0
    %161 = vmatprep.subr.mxu0 0.0
    %162 = vmatpush1.msra.mxu0 0.0
    %163 = vmatprep.subr.mxu0 0.0
    %164 = vmatpush1.msra.mxu0 0.0
    %165 = vmatprep.subr.mxu0 0.0
    %166 = vmatpush1.msra.mxu0 0.0
    %167 = vmatprep.subr.mxu0 0.0
    %168 = vmatpush1.msra.mxu0 0.0
    %169 = vmatprep.subr.mxu0 0.0
    %170 = vmatpush1.msra.mxu0 0.0
    %171 = vmatprep.mubr.f32.mxu0 0.0
    %172 = vmatmul.mubr.f32.gmra.mrb[0].mxu0 %v83
    %v173 = vpop.f32.mrb[0].mxu0
    %v174 = vadd.f32 0.0, %v173
    %v175 = vpop.f32.mrb[0].mxu0
    %176 = vmatprep.mubr.f32.mxu0 0.0
    %177 = vmatmul.mubr.f32.gmra.mrb[0].mxu0 %v84
    %v178 = vpop.f32.mrb[0].mxu0
    %v179 = vadd.f32 0.0, %v178
    %v180 = vpop.f32.mrb[0].mxu0
    %181 = vmatprep.mubr.f32.mxu0 0.0
    %182 = vmatmul.mubr.f32.gmra.mrb[0].mxu0 %v85
    %v183 = vpop.f32.mrb[0].mxu0
    %v184 = vadd.f32 0.0, %v183
    %v185 = vpop.f32.mrb[0].mxu0
    %186 = vmatprep.mubr.f32.mxu0 0.0
    %187 = vmatmul.mubr.f32.gmra.mrb[0].mxu0 %v86
    %v188 = vpop.f32.mrb[0].mxu0
    %v189 = vadd.f32 0.0, %v188
    %v190 = vpop.f32.mrb[0].mxu0
    %191 = vmatprep.mubr.f32.mxu0 0.0
    %192 = vmatmul.mubr.f32.gmra.mrb[0].mxu0 %v87
    %v193 = vpop.f32.mrb[0].mxu0
    %v194 = vadd.f32 0.0, %v193
    %v195 = vpop.f32.mrb[0].mxu0
    %196 = vmatprep.mubr.f32.mxu0 0.0
    %197 = vmatmul.mubr.f32.gmra.mrb[0].mxu0 %v88
    %v198 = vpop.f32.mrb[0].mxu0
    %v199 = vadd.f32 0.0, %v198
    %v200 = vpop.f32.mrb[0].mxu0
    %201 = vmatprep.mubr.f32.mxu0 0.0
    %202 = vmatmul.mubr.f32.gmra.mrb[0].mxu0 %v89
    %v203 = vpop.f32.mrb[0].mxu0
    %v204 = vadd.f32 0.0, %v203
    %v205 = vpop.f32.mrb[0].mxu0
    %206 = vmatprep.mubr.f32.mxu0 0.0
    %207 = vmatmul.mubr.f32.gmra.mrb[0].mxu0 %v90
    %v208 = vpop.f32.mrb[0].mxu0
    %v209 = vadd.f32 0.0, %v208
    %v210 = vpop.f32.mrb[0].mxu0
    %211 = vdwg.mxu0
    %220 = vrot.lane.b32.xlu0 %v174, 120
    %v221 = vpop.permute.xlu0 %220
    %222 = vrot.lane.b32.xlu0 %v179, 120
    %v223 = vpop.permute.xlu0 %222
    %224 = vrot.lane.b32.xlu0 %v184, 120
    %v225 = vpop.permute.xlu0 %224
    %226 = vrot.lane.b32.xlu0 %v189, 120
    %v227 = vpop.permute.xlu0 %226
    %228 = vrot.lane.b32.xlu0 %v194, 120
    %v229 = vpop.permute.xlu0 %228
    %230 = vrot.lane.b32.xlu0 %v199, 120
    %v231 = vpop.permute.xlu0 %230
    %232 = vrot.lane.b32.xlu0 %v204, 120
    %v233 = vpop.permute.xlu0 %232
    %234 = vrot.lane.b32.xlu0 %v209, 120
    %v235 = vpop.permute.xlu0 %234
    %vm236 = vcmask 64512
    %v237 = vsel %vm236, %v174, 0
    %v239 = vsel %vm236, %v179, 0
    %v241 = vsel %vm236, %v184, 0
    %v243 = vsel %vm236, %v189, 0
    %v245 = vsel %vm236, %v194, 0
    %v247 = vsel %vm236, %v199, 0
    %v249 = vsel %vm236, %v204, 0
    %v251 = vsel %vm236, %v209, 0
    %v253 = vsel %vm236, %v221, 0
    %v255 = vsel %vm236, %v223, 0
    %v257 = vsel %vm236, %v225, 0
    %v259 = vsel %vm236, %v227, 0
    %v261 = vsel %vm236, %v229, 0
    %v263 = vsel %vm236, %v231, 0
    %v265 = vsel %vm236, %v233, 0
    %v267 = vsel %vm236, %v235, 0
    %269 = vmatprep.subr.mxu0 0.0
    %270 = vmatpush1.xpose.msra.mxu0 %v253
    %271 = vmatprep.subr.mxu0 0.0
    %272 = vmatpush1.xpose.msra.mxu0 %v255
    %273 = vmatprep.subr.mxu0 0.0
    %274 = vmatpush1.xpose.msra.mxu0 %v257
    %275 = vmatprep.subr.mxu0 0.0
    %276 = vmatpush1.xpose.msra.mxu0 %v259
    %277 = vmatprep.subr.mxu0 0.0
    %278 = vmatpush1.xpose.msra.mxu0 %v261
    %279 = vmatprep.subr.mxu0 0.0
    %280 = vmatpush1.xpose.msra.mxu0 %v263
    %281 = vmatprep.subr.mxu0 0.0
    %282 = vmatpush1.xpose.msra.mxu0 %v265
    %283 = vmatprep.subr.mxu0 0.0
    %284 = vmatpush1.xpose.msra.mxu0 %v267
    %285 = vmatprep.subr.mxu0 0.0
    %286 = vmatpush1.xpose.msra.mxu0 0.0
    %287 = vmatprep.subr.mxu0 0.0
    %288 = vmatpush1.xpose.msra.mxu0 0.0
    %289 = vmatprep.subr.mxu0 0.0
    %290 = vmatpush1.xpose.msra.mxu0 0.0
    %291 = vmatprep.subr.mxu0 0.0
    %292 = vmatpush1.xpose.msra.mxu0 0.0
    %293 = vmatprep.subr.mxu0 0.0
    %294 = vmatpush1.xpose.msra.mxu0 0.0
    %295 = vmatprep.subr.mxu0 0.0
    %296 = vmatpush1.xpose.msra.mxu0 0.0
    %297 = vmatprep.subr.mxu0 0.0
    %298 = vmatpush1.xpose.msra.mxu0 0.0
    %299 = vmatprep.subr.mxu0 0.0
    %300 = vmatpush1.xpose.msra.mxu0 0.0
    %301 = vmatprep.subr.mxu0 0.0
    %302 = vmatpush1.xpose.msra.mxu0 0.0
    %303 = vmatprep.subr.mxu0 0.0
    %304 = vmatpush1.xpose.msra.mxu0 0.0
    %305 = vmatprep.subr.mxu0 0.0
    %306 = vmatpush1.xpose.msra.mxu0 0.0
    %307 = vmatprep.subr.mxu0 0.0
    %308 = vmatpush1.xpose.msra.mxu0 0.0
    %309 = vmatprep.subr.mxu0 0.0
    %310 = vmatpush1.xpose.msra.mxu0 0.0
    %311 = vmatprep.subr.mxu0 0.0
    %312 = vmatpush1.xpose.msra.mxu0 0.0
    %313 = vmatprep.subr.mxu0 0.0
    %314 = vmatpush1.xpose.msra.mxu0 0.0
    %315 = vmatprep.subr.mxu0 0.0
    %316 = vmatpush1.xpose.msra.mxu0 0.0
    %317 = vmatprep.subr.mxu0 0.0
    %318 = vmatpush1.xpose.msra.mxu0 0.0
    %319 = vmatprep.subr.mxu0 0.0
    %320 = vmatpush1.xpose.msra.mxu0 0.0
    %321 = vmatprep.subr.mxu0 0.0
    %322 = vmatpush1.xpose.msra.mxu0 0.0
    %323 = vmatprep.subr.mxu0 0.0
    %324 = vmatpush1.xpose.msra.mxu0 0.0
    %325 = vmatprep.subr.mxu0 0.0
    %326 = vmatpush1.xpose.msra.mxu0 0.0
    %327 = vmatprep.subr.mxu0 0.0
    %328 = vmatpush1.xpose.msra.mxu0 0.0
    %329 = vmatprep.subr.mxu0 0.0
    %330 = vmatpush1.xpose.msra.mxu0 0.0
    %331 = vmatprep.subr.mxu0 0.0
    %332 = vmatpush1.xpose.msra.mxu0 0.0
    %333 = vmatprep.mubr.f32.mxu0 0.0
    %334 = vmatmul.mubr.f32.gmra.mrb[0].mxu0 %v237
    %v335 = vpop.f32.mrb[0].mxu0
    %v336 = vadd.f32 0.0, %v335
    %v337 = vpop.f32.mrb[0].mxu0
    %338 = vmatprep.mubr.f32.mxu0 0.0
    %339 = vmatmul.mubr.f32.gmra.mrb[0].mxu0 %v239
    %v340 = vpop.f32.mrb[0].mxu0
    %v341 = vadd.f32 0.0, %v340
    %v342 = vpop.f32.mrb[0].mxu0
    %343 = vmatprep.mubr.f32.mxu0 0.0
    %344 = vmatmul.mubr.f32.gmra.mrb[0].mxu0 %v241
    %v345 = vpop.f32.mrb[0].mxu0
    %v346 = vadd.f32 0.0, %v345
    %v347 = vpop.f32.mrb[0].mxu0
    %348 = vmatprep.mubr.f32.mxu0 0.0
    %349 = vmatmul.mubr.f32.gmra.mrb[0].mxu0 %v243
    %v350 = vpop.f32.mrb[0].mxu0
    %v351 = vadd.f32 0.0, %v350
    %v352 = vpop.f32.mrb[0].mxu0
    %353 = vmatprep.mubr.f32.mxu0 0.0
    %354 = vmatmul.mubr.f32.gmra.mrb[0].mxu0 %v245
    %v355 = vpop.f32.mrb[0].mxu0
    %v356 = vadd.f32 0.0, %v355
    %v357 = vpop.f32.mrb[0].mxu0
    %358 = vmatprep.mubr.f32.mxu0 0.0
    %359 = vmatmul.mubr.f32.gmra.mrb[0].mxu0 %v247
    %v360 = vpop.f32.mrb[0].mxu0
    %v361 = vadd.f32 0.0, %v360
    %v362 = vpop.f32.mrb[0].mxu0
    %363 = vmatprep.mubr.f32.mxu0 0.0
    %364 = vmatmul.mubr.f32.gmra.mrb[0].mxu0 %v249
    %v365 = vpop.f32.mrb[0].mxu0
    %v366 = vadd.f32 0.0, %v365
    %v367 = vpop.f32.mrb[0].mxu0
    %368 = vmatprep.mubr.f32.mxu0 0.0
    %369 = vmatmul.mubr.f32.gmra.mrb[0].mxu0 %v251
    %v370 = vpop.f32.mrb[0].mxu0
    %v371 = vadd.f32 0.0, %v370
    %v372 = vpop.f32.mrb[0].mxu0
    %373 = vdwg.mxu0
    %v374 = vshra.s32 %v56, 3
    %v375 = vshra.s32 %v57, 3
    %v376 = vshra.s32 %v58, 3
    %v377 = vshra.s32 %v59, 3
    %v378 = vshra.s32 %v60, 3
    %v379 = vshra.s32 %v61, 3
    %v380 = vshra.s32 %v62, 3
    %v381 = vshra.s32 %v63, 3
    %v382 = vshra.s32 %v65, 3
    %vm383 = vcmp.eq.s32.totalorder %v374, %v382
    %vm384 = vcmp.eq.s32.totalorder %v375, %v382
    %vm385 = vcmp.eq.s32.totalorder %v376, %v382
    %vm386 = vcmp.eq.s32.totalorder %v377, %v382
    %vm387 = vcmp.eq.s32.totalorder %v378, %v382
    %vm388 = vcmp.eq.s32.totalorder %v379, %v382
    %vm389 = vcmp.eq.s32.totalorder %v380, %v382
    %vm390 = vcmp.eq.s32.totalorder %v381, %v382
    %vm391 = vcmp.le.s32.totalorder %v65, %v56
    %vm392 = vcmp.le.s32.totalorder %v65, %v57
    %vm393 = vcmp.le.s32.totalorder %v65, %v58
    %vm394 = vcmp.le.s32.totalorder %v65, %v59
    %vm395 = vcmp.le.s32.totalorder %v65, %v60
    %vm396 = vcmp.le.s32.totalorder %v65, %v61
    %vm397 = vcmp.le.s32.totalorder %v65, %v62
    %vm398 = vcmp.le.s32.totalorder %v65, %v63
    %vm399 = vmand %vm383, %vm391
    %vm400 = vmand %vm384, %vm392
    %vm401 = vmand %vm385, %vm393
    %vm402 = vmand %vm386, %vm394
    %vm403 = vmand %vm387, %vm395
    %vm404 = vmand %vm388, %vm396
    %vm405 = vmand %vm389, %vm397
    %vm406 = vmand %vm390, %vm398
    %v407 = vsel %vm399, %v336, -1e+30
    %v408 = vsel %vm400, %v341, -1e+30
    %v409 = vsel %vm401, %v346, -1e+30
    %v410 = vsel %vm402, %v351, -1e+30
    %v411 = vsel %vm403, %v356, -1e+30
    %v412 = vsel %vm404, %v361, -1e+30
    %v413 = vsel %vm405, %v366, -1e+30
    %v414 = vsel %vm406, %v371, -1e+30
    %v415 = vsel %vm49, %v407, -inf
    %416 = vmax.xlane.f32.xlu0 %v415
    %v417 = vpop.xlane.xlu0 %416
    %v418 = vsel %vm49, %v408, -inf
    %419 = vmax.xlane.f32.xlu0 %v418
    %v420 = vpop.xlane.xlu0 %419
    %v421 = vsel %vm49, %v409, -inf
    %422 = vmax.xlane.f32.xlu0 %v421
    %v423 = vpop.xlane.xlu0 %422
    %v424 = vsel %vm49, %v410, -inf
    %425 = vmax.xlane.f32.xlu0 %v424
    %v426 = vpop.xlane.xlu0 %425
    %v427 = vsel %vm49, %v411, -inf
    %428 = vmax.xlane.f32.xlu0 %v427
    %v429 = vpop.xlane.xlu0 %428
    %v430 = vsel %vm49, %v412, -inf
    %431 = vmax.xlane.f32.xlu0 %v430
    %v432 = vpop.xlane.xlu0 %431
    %v433 = vsel %vm49, %v413, -inf
    %434 = vmax.xlane.f32.xlu0 %v433
    %v435 = vpop.xlane.xlu0 %434
    %v436 = vsel %vm49, %v414, -inf
    %437 = vmax.xlane.f32.xlu0 %v436
    %v438 = vpop.xlane.xlu0 %437
    %v439 = vsub.f32 %v407, %v417
    %v440 = vsub.f32 %v408, %v420
    %v441 = vsub.f32 %v409, %v423
    %v442 = vsub.f32 %v410, %v426
    %v443 = vsub.f32 %v411, %v429
    %v444 = vsub.f32 %v412, %v432
    %v445 = vsub.f32 %v413, %v435
    %v446 = vsub.f32 %v414, %v438
    %v447 = vmul.f32 %v439, 1.442695
    %v448 = vpow.pop %v447
    %v449 = vmul.f32 %v440, 1.442695
    %v450 = vpow.pop %v449
    %v451 = vmul.f32 %v441, 1.442695
    %v452 = vpow.pop %v451
    %v453 = vmul.f32 %v442, 1.442695
    %v454 = vpow.pop %v453
    %v455 = vmul.f32 %v443, 1.442695
    %v456 = vpow.pop %v455
    %v457 = vmul.f32 %v444, 1.442695
    %v458 = vpow.pop %v457
    %v459 = vmul.f32 %v445, 1.442695
    %v460 = vpow.pop %v459
    %v461 = vmul.f32 %v446, 1.442695
    %v462 = vpow.pop %v461
    %v463 = vsel %vm49, %v448, 0.0
    %464 = vadd.xlane.f32.xlu0 %v463
    %v465 = vpop.xlane.xlu0 %464
    %v466 = vsel %vm49, %v450, 0.0
    %467 = vadd.xlane.f32.xlu0 %v466
    %v468 = vpop.xlane.xlu0 %467
    %v469 = vsel %vm49, %v452, 0.0
    %470 = vadd.xlane.f32.xlu0 %v469
    %v471 = vpop.xlane.xlu0 %470
    %v472 = vsel %vm49, %v454, 0.0
    %473 = vadd.xlane.f32.xlu0 %v472
    %v474 = vpop.xlane.xlu0 %473
    %v475 = vsel %vm49, %v456, 0.0
    %476 = vadd.xlane.f32.xlu0 %v475
    %v477 = vpop.xlane.xlu0 %476
    %v478 = vsel %vm49, %v458, 0.0
    %479 = vadd.xlane.f32.xlu0 %v478
    %v480 = vpop.xlane.xlu0 %479
    %v481 = vsel %vm49, %v460, 0.0
    %482 = vadd.xlane.f32.xlu0 %v481
    %v483 = vpop.xlane.xlu0 %482
    %v484 = vsel %vm49, %v462, 0.0
    %485 = vadd.xlane.f32.xlu0 %v484
    %v486 = vpop.xlane.xlu0 %485
    %v487 = vrcp.pop %v465
    %v488 = vrcp.pop %v468
    %v489 = vrcp.pop %v471
    %v490 = vrcp.pop %v474
    %v491 = vrcp.pop %v477
    %v492 = vrcp.pop %v480
    %v493 = vrcp.pop %v483
    %v494 = vrcp.pop %v486
    %v495 = vmul.f32 %v448, %v487
    %v496 = vmul.f32 %v450, %v488
    %v497 = vmul.f32 %v452, %v489
    %v498 = vmul.f32 %v454, %v490
    %v499 = vmul.f32 %v456, %v491
    %v500 = vmul.f32 %v458, %v492
    %v501 = vmul.f32 %v460, %v493
    %v502 = vmul.f32 %v462, %v494
    %503 = vrot.lane.b32.xlu0 %v174, 112
    %v504 = vpop.permute.xlu0 %503
    %505 = vrot.lane.b32.xlu0 %v179, 112
    %v506 = vpop.permute.xlu0 %505
    %507 = vrot.lane.b32.xlu0 %v184, 112
    %v508 = vpop.permute.xlu0 %507
    %509 = vrot.lane.b32.xlu0 %v189, 112
    %v510 = vpop.permute.xlu0 %509
    %511 = vrot.lane.b32.xlu0 %v194, 112
    %v512 = vpop.permute.xlu0 %511
    %513 = vrot.lane.b32.xlu0 %v199, 112
    %v514 = vpop.permute.xlu0 %513
    %515 = vrot.lane.b32.xlu0 %v204, 112
    %v516 = vpop.permute.xlu0 %515
    %517 = vrot.lane.b32.xlu0 %v209, 112
    %v518 = vpop.permute.xlu0 %517
    %v528 = vsel %vm49, %v495, 0
    %v531 = vsel %vm49, %v496, 0
    %v534 = vsel %vm49, %v497, 0
    %v537 = vsel %vm49, %v498, 0
    %v540 = vsel %vm49, %v499, 0
    %v543 = vsel %vm49, %v500, 0
    %v546 = vsel %vm49, %v501, 0
    %v549 = vsel %vm49, %v502, 0
    %551 = vmatprep.subr.mxu0 0.0
    %552 = vmatpush1.msra.mxu0 %v504
    %553 = vmatprep.subr.mxu0 0.0
    %554 = vmatpush1.msra.mxu0 %v506
    %555 = vmatprep.subr.mxu0 0.0
    %556 = vmatpush1.msra.mxu0 %v508
    %557 = vmatprep.subr.mxu0 0.0
    %558 = vmatpush1.msra.mxu0 %v510
    %559 = vmatprep.subr.mxu0 0.0
    %560 = vmatpush1.msra.mxu0 %v512
    %561 = vmatprep.subr.mxu0 0.0
    %562 = vmatpush1.msra.mxu0 %v514
    %563 = vmatprep.subr.mxu0 0.0
    %564 = vmatpush1.msra.mxu0 %v516
    %565 = vmatprep.subr.mxu0 0.0
    %566 = vmatpush1.msra.mxu0 %v518
    %567 = vmatprep.subr.mxu0 0.0
    %568 = vmatpush1.msra.mxu0 0.0
    %569 = vmatprep.subr.mxu0 0.0
    %570 = vmatpush1.msra.mxu0 0.0
    %571 = vmatprep.subr.mxu0 0.0
    %572 = vmatpush1.msra.mxu0 0.0
    %573 = vmatprep.subr.mxu0 0.0
    %574 = vmatpush1.msra.mxu0 0.0
    %575 = vmatprep.subr.mxu0 0.0
    %576 = vmatpush1.msra.mxu0 0.0
    %577 = vmatprep.subr.mxu0 0.0
    %578 = vmatpush1.msra.mxu0 0.0
    %579 = vmatprep.subr.mxu0 0.0
    %580 = vmatpush1.msra.mxu0 0.0
    %581 = vmatprep.subr.mxu0 0.0
    %582 = vmatpush1.msra.mxu0 0.0
    %583 = vmatprep.subr.mxu0 0.0
    %584 = vmatpush1.msra.mxu0 0.0
    %585 = vmatprep.subr.mxu0 0.0
    %586 = vmatpush1.msra.mxu0 0.0
    %587 = vmatprep.subr.mxu0 0.0
    %588 = vmatpush1.msra.mxu0 0.0
    %589 = vmatprep.subr.mxu0 0.0
    %590 = vmatpush1.msra.mxu0 0.0
    %591 = vmatprep.subr.mxu0 0.0
    %592 = vmatpush1.msra.mxu0 0.0
    %593 = vmatprep.subr.mxu0 0.0
    %594 = vmatpush1.msra.mxu0 0.0
    %595 = vmatprep.subr.mxu0 0.0
    %596 = vmatpush1.msra.mxu0 0.0
    %597 = vmatprep.subr.mxu0 0.0
    %598 = vmatpush1.msra.mxu0 0.0
    %599 = vmatprep.subr.mxu0 0.0
    %600 = vmatpush1.msra.mxu0 0.0
    %601 = vmatprep.subr.mxu0 0.0
    %602 = vmatpush1.msra.mxu0 0.0
    %603 = vmatprep.subr.mxu0 0.0
    %604 = vmatpush1.msra.mxu0 0.0
    %605 = vmatprep.subr.mxu0 0.0
    %606 = vmatpush1.msra.mxu0 0.0
    %607 = vmatprep.subr.mxu0 0.0
    %608 = vmatpush1.msra.mxu0 0.0
    %609 = vmatprep.subr.mxu0 0.0
    %610 = vmatpush1.msra.mxu0 0.0
    %611 = vmatprep.subr.mxu0 0.0
    %612 = vmatpush1.msra.mxu0 0.0
    %613 = vmatprep.subr.mxu0 0.0
    %614 = vmatpush1.msra.mxu0 0.0
    %615 = vmatprep.mubr.f32.mxu0 0.0
    %616 = vmatmul.mubr.f32.gmra.mrb[0].mxu0 %v528
    %v617 = vpop.f32.mrb[0].mxu0
    %v618 = vadd.f32 0.0, %v617
    %v619 = vpop.f32.mrb[0].mxu0
    %620 = vmatprep.mubr.f32.mxu0 0.0
    %621 = vmatmul.mubr.f32.gmra.mrb[0].mxu0 %v531
    %v622 = vpop.f32.mrb[0].mxu0
    %v623 = vadd.f32 0.0, %v622
    %v624 = vpop.f32.mrb[0].mxu0
    %625 = vmatprep.mubr.f32.mxu0 0.0
    %626 = vmatmul.mubr.f32.gmra.mrb[0].mxu0 %v534
    %v627 = vpop.f32.mrb[0].mxu0
    %v628 = vadd.f32 0.0, %v627
    %v629 = vpop.f32.mrb[0].mxu0
    %630 = vmatprep.mubr.f32.mxu0 0.0
    %631 = vmatmul.mubr.f32.gmra.mrb[0].mxu0 %v537
    %v632 = vpop.f32.mrb[0].mxu0
    %v633 = vadd.f32 0.0, %v632
    %v634 = vpop.f32.mrb[0].mxu0
    %635 = vmatprep.mubr.f32.mxu0 0.0
    %636 = vmatmul.mubr.f32.gmra.mrb[0].mxu0 %v540
    %v637 = vpop.f32.mrb[0].mxu0
    %v638 = vadd.f32 0.0, %v637
    %v639 = vpop.f32.mrb[0].mxu0
    %640 = vmatprep.mubr.f32.mxu0 0.0
    %641 = vmatmul.mubr.f32.gmra.mrb[0].mxu0 %v543
    %v642 = vpop.f32.mrb[0].mxu0
    %v643 = vadd.f32 0.0, %v642
    %v644 = vpop.f32.mrb[0].mxu0
    %645 = vmatprep.mubr.f32.mxu0 0.0
    %646 = vmatmul.mubr.f32.gmra.mrb[0].mxu0 %v546
    %v647 = vpop.f32.mrb[0].mxu0
    %v648 = vadd.f32 0.0, %v647
    %v649 = vpop.f32.mrb[0].mxu0
    %650 = vmatprep.mubr.f32.mxu0 0.0
    %651 = vmatmul.mubr.f32.gmra.mrb[0].mxu0 %v549
    %v652 = vpop.f32.mrb[0].mxu0
    %v653 = vadd.f32 0.0, %v652
    %v654 = vpop.f32.mrb[0].mxu0
    %655 = vdwg.mxu0
    %658 = vrot.lane.b32.xlu0 %v628, 8
    %v659 = vpop.permute.xlu0 %658
    %660 = vrot.lane.b32.xlu0 %v633, 8
    %v661 = vpop.permute.xlu0 %660
    %666 = vrot.lane.b32.xlu0 %v638, 16
    %v667 = vpop.permute.xlu0 %666
    %668 = vrot.lane.b32.xlu0 %v643, 16
    %v669 = vpop.permute.xlu0 %668
    %674 = vrot.lane.b32.xlu0 %v648, 24
    %v675 = vpop.permute.xlu0 %674
    %676 = vrot.lane.b32.xlu0 %v653, 24
    %v677 = vpop.permute.xlu0 %676
    %v680 = vsel %vm236, %v618, %v659
    %v681 = vsel %vm236, %v623, %v661
    %vm682 = vcmask 130048
    %v683 = vsel %vm682, %v680, %v667
    %v684 = vsel %vm682, %v681, %v669
    %vm685 = vcmask 195584
    %v686 = vsel %vm685, %v683, %v675
    %v687 = vsel %vm685, %v684, %v677
    %v688 = vld [vmem:[%s2] sm:$0xff]
    %v689 = vld [vmem:[%s2 + $0x8] sm:$0xff]
    %v690 = vld [vmem:[%s2 + $0x10] sm:$0xff]
    %v691 = vld [vmem:[%s2 + $0x18] sm:$0xff]
    %v692 = vld [vmem:[%s3] sm:$0x1]
    %v694 = vlaneseq
    %v695 = vshrl.u32 %v694, 7
    %v696 = vsub.s32 0, %v695
    %v697 = vrot.slane %v692, %v696
    %v700 = vsel %vm46, %v686, 0
    %v703 = vsel %vm46, %v687, 0
    %705 = vmatprep.subr.mxu0 0.0
    %706 = vmatpush1.msra.mxu0 %v688
    %707 = vmatprep.subr.mxu0 0.0
    %708 = vmatpush1.msra.mxu0 %v689
    %709 = vmatprep.subr.mxu0 0.0
    %710 = vmatpush1.msra.mxu0 %v690
    %711 = vmatprep.subr.mxu0 0.0
    %712 = vmatpush1.msra.mxu0 %v691
    %713 = vmatprep.subr.mxu0 0.0
    %714 = vmatpush1.msra.mxu0 0.0
    %715 = vmatprep.subr.mxu0 0.0
    %716 = vmatpush1.msra.mxu0 0.0
    %717 = vmatprep.subr.mxu0 0.0
    %718 = vmatpush1.msra.mxu0 0.0
    %719 = vmatprep.subr.mxu0 0.0
    %720 = vmatpush1.msra.mxu0 0.0
    %721 = vmatprep.subr.mxu0 0.0
    %722 = vmatpush1.msra.mxu0 0.0
    %723 = vmatprep.subr.mxu0 0.0
    %724 = vmatpush1.msra.mxu0 0.0
    %725 = vmatprep.subr.mxu0 0.0
    %726 = vmatpush1.msra.mxu0 0.0
    %727 = vmatprep.subr.mxu0 0.0
    %728 = vmatpush1.msra.mxu0 0.0
    %729 = vmatprep.subr.mxu0 0.0
    %730 = vmatpush1.msra.mxu0 0.0
    %731 = vmatprep.subr.mxu0 0.0
    %732 = vmatpush1.msra.mxu0 0.0
    %733 = vmatprep.subr.mxu0 0.0
    %734 = vmatpush1.msra.mxu0 0.0
    %735 = vmatprep.subr.mxu0 0.0
    %736 = vmatpush1.msra.mxu0 0.0
    %737 = vmatprep.subr.mxu0 0.0
    %738 = vmatpush1.msra.mxu0 0.0
    %739 = vmatprep.subr.mxu0 0.0
    %740 = vmatpush1.msra.mxu0 0.0
    %741 = vmatprep.subr.mxu0 0.0
    %742 = vmatpush1.msra.mxu0 0.0
    %743 = vmatprep.subr.mxu0 0.0
    %744 = vmatpush1.msra.mxu0 0.0
    %745 = vmatprep.subr.mxu0 0.0
    %746 = vmatpush1.msra.mxu0 0.0
    %747 = vmatprep.subr.mxu0 0.0
    %748 = vmatpush1.msra.mxu0 0.0
    %749 = vmatprep.subr.mxu0 0.0
    %750 = vmatpush1.msra.mxu0 0.0
    %751 = vmatprep.subr.mxu0 0.0
    %752 = vmatpush1.msra.mxu0 0.0
    %753 = vmatprep.subr.mxu0 0.0
    %754 = vmatpush1.msra.mxu0 0.0
    %755 = vmatprep.subr.mxu0 0.0
    %756 = vmatpush1.msra.mxu0 0.0
    %757 = vmatprep.subr.mxu0 0.0
    %758 = vmatpush1.msra.mxu0 0.0
    %759 = vmatprep.subr.mxu0 0.0
    %760 = vmatpush1.msra.mxu0 0.0
    %761 = vmatprep.subr.mxu0 0.0
    %762 = vmatpush1.msra.mxu0 0.0
    %763 = vmatprep.subr.mxu0 0.0
    %764 = vmatpush1.msra.mxu0 0.0
    %765 = vmatprep.subr.mxu0 0.0
    %766 = vmatpush1.msra.mxu0 0.0
    %767 = vmatprep.subr.mxu0 0.0
    %768 = vmatpush1.msra.mxu0 0.0
    %769 = vmatprep.mubr.f32.mxu0 0.0
    %770 = vmatmul.mubr.f32.gmra.mrb[0].mxu0 %v700
    %v771 = vpop.f32.mrb[0].mxu0
    %v772 = vadd.f32 %v697, %v771
    %v773 = vpop.f32.mrb[0].mxu0
    %774 = vmatprep.mubr.f32.mxu0 0.0
    %775 = vmatmul.mubr.f32.gmra.mrb[0].mxu0 %v703
    %v776 = vpop.f32.mrb[0].mxu0
    %v777 = vadd.f32 %v697, %v776
    %v778 = vpop.f32.mrb[0].mxu0
    %779 = vdwg.mxu0
    %v780 = vmax.f32 %v772, 0.0
    %v781 = vmax.f32 %v777, 0.0
    %v782 = vld [vmem:[%s4] sm:$0xff]
    %v783 = vld [vmem:[%s4 + $0x8] sm:$0xff]
    %v784 = vld [vmem:[%s4 + $0x10] sm:$0xff]
    %v785 = vld [vmem:[%s4 + $0x18] sm:$0xff]
    %v786 = vld [vmem:[%s4 + $0x20] sm:$0xff]
    %v787 = vld [vmem:[%s4 + $0x28] sm:$0xff]
    %v788 = vld [vmem:[%s4 + $0x30] sm:$0xff]
    %v789 = vld [vmem:[%s4 + $0x38] sm:$0xff]
    %v790 = vld [vmem:[%s5] sm:$0x1]
    %v792 = vlaneseq
    %v793 = vshrl.u32 %v792, 7
    %v794 = vsub.s32 0, %v793
    %v795 = vrot.slane %v790, %v794
    %v798 = vsel %vm49, %v780, 0
    %v801 = vsel %vm49, %v781, 0
    %803 = vmatprep.subr.mxu0 0.0
    %804 = vmatpush1.msra.mxu0 %v782
    %805 = vmatprep.subr.mxu0 0.0
    %806 = vmatpush1.msra.mxu0 %v783
    %807 = vmatprep.subr.mxu0 0.0
    %808 = vmatpush1.msra.mxu0 %v784
    %809 = vmatprep.subr.mxu0 0.0
    %810 = vmatpush1.msra.mxu0 %v785
    %811 = vmatprep.subr.mxu0 0.0
    %812 = vmatpush1.msra.mxu0 %v786
    %813 = vmatprep.subr.mxu0 0.0
    %814 = vmatpush1.msra.mxu0 %v787
    %815 = vmatprep.subr.mxu0 0.0
    %816 = vmatpush1.msra.mxu0 %v788
    %817 = vmatprep.subr.mxu0 0.0
    %818 = vmatpush1.msra.mxu0 %v789
    %819 = vmatprep.subr.mxu0 0.0
    %820 = vmatpush1.msra.mxu0 0.0
    %821 = vmatprep.subr.mxu0 0.0
    %822 = vmatpush1.msra.mxu0 0.0
    %823 = vmatprep.subr.mxu0 0.0
    %824 = vmatpush1.msra.mxu0 0.0
    %825 = vmatprep.subr.mxu0 0.0
    %826 = vmatpush1.msra.mxu0 0.0
    %827 = vmatprep.subr.mxu0 0.0
    %828 = vmatpush1.msra.mxu0 0.0
    %829 = vmatprep.subr.mxu0 0.0
    %830 = vmatpush1.msra.mxu0 0.0
    %831 = vmatprep.subr.mxu0 0.0
    %832 = vmatpush1.msra.mxu0 0.0
    %833 = vmatprep.subr.mxu0 0.0
    %834 = vmatpush1.msra.mxu0 0.0
    %835 = vmatprep.subr.mxu0 0.0
    %836 = vmatpush1.msra.mxu0 0.0
    %837 = vmatprep.subr.mxu0 0.0
    %838 = vmatpush1.msra.mxu0 0.0
    %839 = vmatprep.subr.mxu0 0.0
    %840 = vmatpush1.msra.mxu0 0.0
    %841 = vmatprep.subr.mxu0 0.0
    %842 = vmatpush1.msra.mxu0 0.0
    %843 = vmatprep.subr.mxu0 0.0
    %844 = vmatpush1.msra.mxu0 0.0
    %845 = vmatprep.subr.mxu0 0.0
    %846 = vmatpush1.msra.mxu0 0.0
    %847 = vmatprep.subr.mxu0 0.0
    %848 = vmatpush1.msra.mxu0 0.0
    %849 = vmatprep.subr.mxu0 0.0
    %850 = vmatpush1.msra.mxu0 0.0
    %851 = vmatprep.subr.mxu0 0.0
    %852 = vmatpush1.msra.mxu0 0.0
    %853 = vmatprep.subr.mxu0 0.0
    %854 = vmatpush1.msra.mxu0 0.0
    %855 = vmatprep.subr.mxu0 0.0
    %856 = vmatpush1.msra.mxu0 0.0
    %857 = vmatprep.subr.mxu0 0.0
    %858 = vmatpush1.msra.mxu0 0.0
    %859 = vmatprep.subr.mxu0 0.0
    %860 = vmatpush1.msra.mxu0 0.0
    %861 = vmatprep.subr.mxu0 0.0
    %862 = vmatpush1.msra.mxu0 0.0
    %863 = vmatprep.subr.mxu0 0.0
    %864 = vmatpush1.msra.mxu0 0.0
    %865 = vmatprep.subr.mxu0 0.0
    %866 = vmatpush1.msra.mxu0 0.0
    %867 = vmatprep.mubr.f32.mxu0 0.0
    %868 = vmatmul.mubr.f32.gmra.mrb[0].mxu0 %v798
    %v869 = vpop.f32.mrb[0].mxu0
    %v870 = vadd.f32 %v795, %v869
    %v871 = vpop.f32.mrb[0].mxu0
    %872 = vmatprep.mubr.f32.mxu0 0.0
    %873 = vmatmul.mubr.f32.gmra.mrb[0].mxu0 %v801
    %v874 = vpop.f32.mrb[0].mxu0
    %v875 = vadd.f32 %v795, %v874
    %v876 = vpop.f32.mrb[0].mxu0
    %877 = vdwg.mxu0
    %878 = vst [vmem:[#allocation2] sm:$0xff] %v870
    %879 = vst [vmem:[#allocation2 + $0x8] sm:$0xff] %v875
    // Predicated region
    $region26: #{tpu_custom_call.1} parent=1 // pred_check
      _
    $region27: #{tpu_custom_call.1} parent=1 // pred_check_branch
      %881 = sbr.rel (0) target = $region29
    $region28: #{tpu_custom_call.1} parent=1 // pred_region
      %s883 = ssub.s32 256, 256
      %884 = vsyncadd [#allocation3], %s883
      %s885 = sshll.u32 [#allocation2], 4
      %s886 = int_to_ptr.vmem [resolvable:$true] %s885
      %891 = dma.vmem_to_hbm [thread:$0]  %s886, 256, %s6, [#allocation3], 128, 128, 8
    $region29: #{tpu_custom_call.1} parent=1 // pred_fallthru
      _
    // Predicated region
    $region30: #{tpu_custom_call.1} parent=1 // pred_check
      _
    $region31: #{tpu_custom_call.1} parent=1 // pred_check_branch
      %893 = sbr.rel (0) target = $region33
    $region32: #{tpu_custom_call.1} parent=1 // pred_region
      %894 = dma.done [#allocation3], 256
    $region33: #{tpu_custom_call.1} parent=1 // pred_fallthru
      _
    %895 = vsyncpa [#allocation3], 1

</llo_original>
